<compile_context>
chip_gen: v7x
topology: tpu7x:2x2x1
jax: 0.10.0
libtpu: 0.0.40
codegen_flags: <defaults>
</compile_context>

<pallas_src>
import jax
import jax.numpy as jnp
from jax.experimental import pallas as pl
from jax.experimental.pallas import tpu as pltpu

_LANES = 128
_SUBLANES = 8
_MAX_TILE_ROWS = 2048  # (2048, 128) f32 block ~= 1 MiB per input per buffer


def _rrse_partial_kernel(yh_ref, y_ref, acc_ref):
    """Accumulates lane-wise partial sums into the resident output accumulator.

    acc_ref: (3, 8, 128) f32, resident across the (single, 'arbitrary') grid axis.
      acc[0] = sum((y_hat - y)^2), acc[1] = sum(y), acc[2] = sum(y^2)
    """
    i = pl.program_id(0)

    @pl.when(i == 0)
    def _():
        acc_ref[...] = jnp.zeros_like(acc_ref)

    yh = yh_ref[...].astype(jnp.float32)
    y = y_ref[...].astype(jnp.float32)
    d = yh - y

    # Sublane-aligned fold: (TR, 128) -> (TR//8, 8, 128) -> sum over axis 0.
    # Pure VPU vreg adds; no cross-lane/XLU work until the wrapper.
    acc_ref[0] += jnp.sum((d * d).reshape(-1, _SUBLANES, _LANES), axis=0)
    acc_ref[1] += jnp.sum(y.reshape(-1, _SUBLANES, _LANES), axis=0)
    acc_ref[2] += jnp.sum((y * y).reshape(-1, _SUBLANES, _LANES), axis=0)


def _rrse_partials(yh2d, y2d, tile_rows):
    rows = yh2d.shape[0]
    grid = (rows // tile_rows,)
    return pl.pallas_call(
        _rrse_partial_kernel,
        out_shape=jax.ShapeDtypeStruct((3, _SUBLANES, _LANES), jnp.float32),
        grid_spec=pltpu.PrefetchScalarGridSpec(
            num_scalar_prefetch=0,
            grid=grid,
            in_specs=[
                pl.BlockSpec((tile_rows, _LANES), lambda i: (i, 0)),
                pl.BlockSpec((tile_rows, _LANES), lambda i: (i, 0)),
            ],
            out_specs=pl.BlockSpec(
                (3, _SUBLANES, _LANES), lambda i: (0, 0, 0)
            ),
        ),
        compiler_params=pltpu.CompilerParams(
            dimension_semantics=("arbitrary",)
        ),
    )(yh2d, y2d)


def root_relative_squared_error(y_hat, y):
    """Pallas TPU implementation of RootRelativeSquaredError.forward."""
    assert y_hat.shape == y.shape, "y_hat and y must have the same shape"
    n = int(y.size)

    # Flatten only (keep original dtype; cast to f32 inside the kernel).
    yh_flat = jnp.ravel(y_hat)
    y_flat = jnp.ravel(y)

    # Pick a tile size: as large as possible (<= _MAX_TILE_ROWS rows), multiple
    # of 8 sublanes.  Only the multiple-of-chunk prefix goes through Pallas;
    # the remainder (< one chunk) is handled in plain JAX below (no padding).
    rows_full = n // _LANES
    if rows_full >= _SUBLANES:
        tile_rows = min(_MAX_TILE_ROWS, (rows_full // _SUBLANES) * _SUBLANES)
        chunk = tile_rows * _LANES
        n_main = (n // chunk) * chunk
    else:
        tile_rows = 0
        n_main = 0

    s0 = jnp.float32(0.0)  # sum((y_hat - y)^2)
    s1 = jnp.float32(0.0)  # sum(y)
    s2 = jnp.float32(0.0)  # sum(y^2)

    if n_main > 0:
        yh2d = yh_flat[:n_main].reshape(n_main // _LANES, _LANES)
        y2d = y_flat[:n_main].reshape(n_main // _LANES, _LANES)
        acc = _rrse_partials(yh2d, y2d, tile_rows)
        s0 = s0 + jnp.sum(acc[0])
        s1 = s1 + jnp.sum(acc[1])
        s2 = s2 + jnp.sum(acc[2])

    if n_main < n:
        # Tail (< one chunk of elements) in plain JAX.
        yh_t = yh_flat[n_main:].astype(jnp.float32)
        y_t = y_flat[n_main:].astype(jnp.float32)
        d_t = yh_t - y_t
        s0 = s0 + jnp.sum(d_t * d_t)
        s1 = s1 + jnp.sum(y_t)
        s2 = s2 + jnp.sum(y_t * y_t)

    # Finalize: sum((y - mean(y))^2) == s2 - s1^2 / N  (single-pass form).
    n_f = jnp.float32(n)
    numerator = s0
    denominator = s2 - (s1 * s1) / n_f
    return jnp.sqrt(numerator / denominator)


def _rrse_reference(y_hat, y):
    y_hat = y_hat.astype(jnp.float32)
    y = y.astype(jnp.float32)
    numerator = jnp.sum((y_hat - y) ** 2)
    denominator = jnp.sum((y - jnp.mean(y)) ** 2)
    return jnp.sqrt(numerator / denominator)


if __name__ == "__main__":
    key = jax.random.PRNGKey(0)
    k1, k2 = jax.random.split(key)
    # Shapes consistent with a regression metric over (batch, channels, H, W).
    shape = (2, 4, 16, 16)
    y_hat = jax.random.normal(k1, shape, dtype=jnp.float32)
    y = jax.random.normal(k2, shape, dtype=jnp.float32)

    result = root_relative_squared_error(y_hat, y)
    result = jax.block_until_ready(result)

    ref = _rrse_reference(y_hat, y)
    assert jnp.allclose(result, ref, rtol=1e-5, atol=1e-6), (result, ref)
    print("KERNEL_OK")
</pallas_src>

<mosaic_0001>
module attributes {stable_mosaic.version = 11 : i64} {
  func.func @_rrse_partial_kernel(%arg0: i32, %arg1: memref<16x128xf32, #tpu.memory_space<vmem>>, %arg2: memref<16x128xf32, #tpu.memory_space<vmem>>, %arg3: memref<3x8x128xf32, #tpu.memory_space<vmem>>) attributes {dimension_semantics = [#tpu.dimension_semantics<arbitrary>], iteration_bounds = array<i64: 1>, scalar_prefetch = 0 : i64, scratch_operands = 0 : i64, tpu.core_type = #tpu.core_type<tc>, window_params = [{transform_indices = @transform_0, window_bounds = array<i64: 16, 128>}, {transform_indices = @transform_1, window_bounds = array<i64: 16, 128>}, {pipeline_mode = #tpu.pipeline_mode<synchronous>, transform_indices = @transform_2, window_bounds = array<i64: 3, 8, 128>}]} {
    %c0_i32 = arith.constant 0 : i32
    %0 = arith.cmpi eq, %arg0, %c0_i32 : i32
    %1 = arith.extui %0 : i1 to i32
    %c0_i32_0 = arith.constant 0 : i32
    %2 = arith.cmpi ne, %1, %c0_i32_0 : i32
    scf.if %2 {
      %cst_22 = arith.constant 0.000000e+00 : f32
      %32 = vector.broadcast %cst_22 : f32 to vector<3x8x128xf32>
      %c0_23 = arith.constant 0 : index
      %c0_24 = arith.constant 0 : index
      %c0_25 = arith.constant 0 : index
      %33 = vector.load %arg3[%c0_23, %c0_24, %c0_25] : memref<3x8x128xf32, #tpu.memory_space<vmem>>, vector<3x8x128xf32>
      tpu.vector_store %arg3[%c0_23, %c0_24, %c0_25], %32 {strides = array<i32>} : memref<3x8x128xf32, #tpu.memory_space<vmem>>, vector<3x8x128xf32>,
    } else {
    }
    %c0 = arith.constant 0 : index
    %c0_1 = arith.constant 0 : index
    %3 = vector.load %arg1[%c0, %c0_1] : memref<16x128xf32, #tpu.memory_space<vmem>>, vector<16x128xf32>
    %c0_2 = arith.constant 0 : index
    %c0_3 = arith.constant 0 : index
    %4 = vector.load %arg2[%c0_2, %c0_3] : memref<16x128xf32, #tpu.memory_space<vmem>>, vector<16x128xf32>
    %5 = arith.subf %3, %4 : vector<16x128xf32>
    %c0_4 = arith.constant 0 : index
    %c0_5 = arith.constant 0 : index
    %c0_6 = arith.constant 0 : index
    %6 = vector.load %arg3[%c0_4, %c0_5, %c0_6] : memref<3x8x128xf32, #tpu.memory_space<vmem>>, vector<1x8x128xf32>
    %7 = vector.shape_cast %6 : vector<1x8x128xf32> to vector<8x128xf32>
    %8 = arith.mulf %5, %5 : vector<16x128xf32>
    %9 = vector.shape_cast %8 : vector<16x128xf32> to vector<2x8x128xf32>
    %cst = arith.constant dense<0.000000e+00> : vector<8x128xf32>
    %10 = vector.multi_reduction <add>, %9, %cst [0] : vector<2x8x128xf32> to vector<8x128xf32>
    %11 = arith.addf %7, %10 : vector<8x128xf32>
    %c0_7 = arith.constant 0 : index
    %c0_8 = arith.constant 0 : index
    %c0_9 = arith.constant 0 : index
    %12 = vector.load %arg3[%c0_7, %c0_8, %c0_9] : memref<3x8x128xf32, #tpu.memory_space<vmem>>, vector<1x8x128xf32>
    %13 = vector.shape_cast %12 : vector<1x8x128xf32> to vector<8x128xf32>
    %14 = vector.shape_cast %11 : vector<8x128xf32> to vector<1x8x128xf32>
    tpu.vector_store %arg3[%c0_7, %c0_8, %c0_9], %14 {strides = array<i32>} : memref<3x8x128xf32, #tpu.memory_space<vmem>>, vector<1x8x128xf32>,
    %c1 = arith.constant 1 : index
    %c0_10 = arith.constant 0 : index
    %c0_11 = arith.constant 0 : index
    %15 = vector.load %arg3[%c1, %c0_10, %c0_11] : memref<3x8x128xf32, #tpu.memory_space<vmem>>, vector<1x8x128xf32>
    %16 = vector.shape_cast %15 : vector<1x8x128xf32> to vector<8x128xf32>
    %17 = vector.shape_cast %4 : vector<16x128xf32> to vector<2x8x128xf32>
    %cst_12 = arith.constant dense<0.000000e+00> : vector<8x128xf32>
    %18 = vector.multi_reduction <add>, %17, %cst_12 [0] : vector<2x8x128xf32> to vector<8x128xf32>
    %19 = arith.addf %16, %18 : vector<8x128xf32>
    %c1_13 = arith.constant 1 : index
    %c0_14 = arith.constant 0 : index
    %c0_15 = arith.constant 0 : index
    %20 = vector.load %arg3[%c1_13, %c0_14, %c0_15] : memref<3x8x128xf32, #tpu.memory_space<vmem>>, vector<1x8x128xf32>
    %21 = vector.shape_cast %20 : vector<1x8x128xf32> to vector<8x128xf32>
    %22 = vector.shape_cast %19 : vector<8x128xf32> to vector<1x8x128xf32>
    tpu.vector_store %arg3[%c1_13, %c0_14, %c0_15], %22 {strides = array<i32>} : memref<3x8x128xf32, #tpu.memory_space<vmem>>, vector<1x8x128xf32>,
    %c2 = arith.constant 2 : index
    %c0_16 = arith.constant 0 : index
    %c0_17 = arith.constant 0 : index
    %23 = vector.load %arg3[%c2, %c0_16, %c0_17] : memref<3x8x128xf32, #tpu.memory_space<vmem>>, vector<1x8x128xf32>
    %24 = vector.shape_cast %23 : vector<1x8x128xf32> to vector<8x128xf32>
    %25 = arith.mulf %4, %4 : vector<16x128xf32>
    %26 = vector.shape_cast %25 : vector<16x128xf32> to vector<2x8x128xf32>
    %cst_18 = arith.constant dense<0.000000e+00> : vector<8x128xf32>
    %27 = vector.multi_reduction <add>, %26, %cst_18 [0] : vector<2x8x128xf32> to vector<8x128xf32>
    %28 = arith.addf %24, %27 : vector<8x128xf32>
    %c2_19 = arith.constant 2 : index
    %c0_20 = arith.constant 0 : index
    %c0_21 = arith.constant 0 : index
    %29 = vector.load %arg3[%c2_19, %c0_20, %c0_21] : memref<3x8x128xf32, #tpu.memory_space<vmem>>, vector<1x8x128xf32>
    %30 = vector.shape_cast %29 : vector<1x8x128xf32> to vector<8x128xf32>
    %31 = vector.shape_cast %28 : vector<8x128xf32> to vector<1x8x128xf32>
    tpu.vector_store %arg3[%c2_19, %c0_20, %c0_21], %31 {strides = array<i32>} : memref<3x8x128xf32, #tpu.memory_space<vmem>>, vector<1x8x128xf32>,
    return
  }
  func.func @transform_0(%arg0: i32) -> (i32, i32) {
    %c0_i32 = arith.constant 0 : i32
    %c0_i32_0 = arith.constant 0 : i32
    return %arg0, %c0_i32 : i32, i32
  }
  func.func @transform_1(%arg0: i32) -> (i32, i32) {
    %c0_i32 = arith.constant 0 : i32
    %c0_i32_0 = arith.constant 0 : i32
    return %arg0, %c0_i32 : i32, i32
  }
  func.func @transform_2(%arg0: i32) -> (i32, i32, i32) {
    %c0_i32 = arith.constant 0 : i32
    %c0_i32_0 = arith.constant 0 : i32
    %c0_i32_1 = arith.constant 0 : i32
    %c0_i32_2 = arith.constant 0 : i32
    return %c0_i32, %c0_i32_0, %c0_i32_1 : i32, i32, i32
  }
}

</mosaic_0001>

<llo_original>
// kernel: tpu_custom_call.1
$region0: #{tpu_custom_call.1}
  #allocation0 [shape = 'u32[]', space=smem, size = 0x4, offset = 0x4, fixed_abs, tag = 'smem constant byte address 0x4 - core index']
  #allocation1 [shape = 'u32[144,128]{1,0:T(1,128)}', space=vmem, size = 0x12000, scoped, tag = 'internal scratch']
  %s0 = inlined_call_operand.hbm [shape: f32[16,128], index: 0, kind: input, shape index: {}]
  %s1 = inlined_call_operand.hbm [shape: f32[16,128], index: 1, kind: input, shape index: {}]
  %s2 = inlined_call_operand.hbm [shape: f32[3,8,128], index: 2, kind: output, shape index: {}]
  %s3 = sld [smem:[#allocation0]]
  $region30: #{tpu_custom_call.1} parent=0
    _
  %s5 = ssub.s32 1, %s3
  %s6 = scalar_select 0, %s5, %s3
  $region1: #{tpu_custom_call.1} parent=0
    #allocation2 [shape = 'u8[8192]{0}', space=vmem, size = 0x2000, scoped, tag = 'input window, operand 0, single buffered']
    #allocation3 [shape = 's32[1]{0}', space=sflag, size = 0x4, scoped, tag = 'scoped memory for tpu_custom_call.1']
    #allocation4 [shape = 's32[1]{0}', space=sflag, size = 0x4, scoped, tag = 'scoped memory for tpu_custom_call.1']
    #allocation5 [shape = 'u8[8192]{0}', space=vmem, size = 0x2000, scoped, tag = 'input window, operand 1, single buffered']
    #allocation6 [shape = 's32[1]{0}', space=sflag, size = 0x4, scoped, tag = 'scoped memory for tpu_custom_call.1']
    #allocation7 [shape = 'u8[12288]{0}', space=vmem, size = 0x3000, scoped, tag = 'output window, operand 0, single buffered']
    %7 = vsyncpa [#allocation3], 0
    %8 = vsyncpa [#allocation6], 0
    %9 = vsyncpa [#allocation4], 0
    // Predicated region
    $region2: #{tpu_custom_call.1} parent=1 // pred_check
      _
    $region3: #{tpu_custom_call.1} parent=1 // pred_check_branch
      %11 = sbr.rel (0) target = $region5
    $region4: #{tpu_custom_call.1} parent=1 // pred_region
      %s13 = ssub.s32 256, 256
      %14 = vsyncadd [#allocation3], %s13
      %s15 = sshll.u32 [#allocation2], 4
      %s16 = int_to_ptr.vmem [resolvable:$true] %s15
      %21 = dma.hbm_to_vmem [thread:$0]  %s0, 256, %s16, [#allocation3], 128, 128, 8
    $region5: #{tpu_custom_call.1} parent=1 // pred_fallthru
      _
    // Predicated region
    $region6: #{tpu_custom_call.1} parent=1 // pred_check
      _
    $region7: #{tpu_custom_call.1} parent=1 // pred_check_branch
      %23 = sbr.rel (0) target = $region9
    $region8: #{tpu_custom_call.1} parent=1 // pred_region
      %s25 = ssub.s32 256, 256
      %26 = vsyncadd [#allocation6], %s25
      %s27 = sshll.u32 [#allocation5], 4
      %s28 = int_to_ptr.vmem [resolvable:$true] %s27
      %33 = dma.hbm_to_vmem [thread:$0]  %s1, 256, %s28, [#allocation6], 128, 128, 8
    $region9: #{tpu_custom_call.1} parent=1 // pred_fallthru
      _
    // Predicated region
    $region10: #{tpu_custom_call.1} parent=1 // pred_check
      _
    $region11: #{tpu_custom_call.1} parent=1 // pred_check_branch
      %35 = sbr.rel (0) target = $region13
    $region12: #{tpu_custom_call.1} parent=1 // pred_region
      %36 = dma.done [#allocation3], 256
    $region13: #{tpu_custom_call.1} parent=1 // pred_fallthru
      _
    // Predicated region
    $region14: #{tpu_custom_call.1} parent=1 // pred_check
      _
    $region15: #{tpu_custom_call.1} parent=1 // pred_check_branch
      %38 = sbr.rel (0) target = $region17
    $region16: #{tpu_custom_call.1} parent=1 // pred_region
      %39 = dma.done [#allocation6], 256
    $region17: #{tpu_custom_call.1} parent=1 // pred_fallthru
      _
    %p40 = scmp.eq.s32.totalorder 0, 0
    // Predicated region
    $region18: #{tpu_custom_call.1} parent=1 // pred_check
      %p41 = pneg %p40
    $region19: #{tpu_custom_call.1} parent=1 // pred_check_branch
      %43 = sbr.rel (%p41) target = $region21
    $region20: #{tpu_custom_call.1} parent=1 // pred_region
      %44 = vst [vmem:[#allocation7] sm:$0xff] 0.0
      %45 = vst [vmem:[#allocation7 + $0x8] sm:$0xff] 0.0
      %46 = vst [vmem:[#allocation7 + $0x10] sm:$0xff] 0.0
    $region21: #{tpu_custom_call.1} parent=1 // pred_fallthru
      _
    %v47 = vld [vmem:[#allocation2] sm:$0xff]
    %v48 = vld [vmem:[#allocation2 + $0x8] sm:$0xff]
    %v49 = vld [vmem:[#allocation5] sm:$0xff]
    %v50 = vld [vmem:[#allocation5 + $0x8] sm:$0xff]
    %v51 = vsub.f32 %v47, %v49
    %v52 = vsub.f32 %v48, %v50
    %v53 = vld [vmem:[#allocation7] sm:$0xff]
    %v54 = vmul.f32 %v51, %v51
    %v55 = vmul.f32 %v52, %v52
    %v56 = vadd.f32 %v54, %v55
    %v57 = vadd.f32 %v53, %v56
    %58 = vst [vmem:[#allocation7] sm:$0xff] %v57
    %s59 = scalar_lea.vmem [#allocation7], 8
    %v60 = vld [vmem:[%s59] sm:$0xff]
    %v61 = vadd.f32 %v49, %v50
    %v62 = vadd.f32 %v60, %v61
    %63 = vst [vmem:[%s59] sm:$0xff] %v62
    %s64 = scalar_lea.vmem [#allocation7], 16
    %v65 = vld [vmem:[%s64] sm:$0xff]
    %v66 = vmul.f32 %v49, %v49
    %v67 = vmul.f32 %v50, %v50
    %v68 = vadd.f32 %v66, %v67
    %v69 = vadd.f32 %v65, %v68
    %70 = vst [vmem:[%s64] sm:$0xff] %v69
    // Predicated region
    $region22: #{tpu_custom_call.1} parent=1 // pred_check
      _
    $region23: #{tpu_custom_call.1} parent=1 // pred_check_branch
      %72 = sbr.rel (0) target = $region25
    $region24: #{tpu_custom_call.1} parent=1 // pred_region
      %s74 = ssub.s32 384, 384
      %75 = vsyncadd [#allocation4], %s74
      %s76 = sshll.u32 [#allocation7], 4
      %s77 = int_to_ptr.vmem [resolvable:$true] %s76
      %82 = dma.vmem_to_hbm [thread:$0]  %s77, 384, %s2, [#allocation4], 128, 128, 8
    $region25: #{tpu_custom_call.1} parent=1 // pred_fallthru
      _
    // Predicated region
    $region26: #{tpu_custom_call.1} parent=1 // pred_check
      _
    $region27: #{tpu_custom_call.1} parent=1 // pred_check_branch
      %84 = sbr.rel (0) target = $region29
    $region28: #{tpu_custom_call.1} parent=1 // pred_region
      %85 = dma.done [#allocation4], 384
    $region29: #{tpu_custom_call.1} parent=1 // pred_fallthru
      _
    %86 = vsyncpa [#allocation3], 1
    %87 = vsyncpa [#allocation6], 1
    %88 = vsyncpa [#allocation4], 1

</llo_original>
